<compile_context>
chip_gen: v7x
topology: tpu7x:2x2x1
jax: 0.10.0
libtpu: 0.0.40
codegen_flags: <defaults>
</compile_context>

<pallas_src>
import functools
import math

import jax
import jax.numpy as jnp
from jax import lax
from jax.experimental import pallas as pl
from jax.experimental.pallas import tpu as pltpu


# --------------------------------------------------------------------------- #
# process_graph: A_hat = D^{-1} (A + I), tiled over row blocks (row-independent).
# --------------------------------------------------------------------------- #
def process_graph_kernel(a_ref, a_hat_ref, *, row_tile):
    i = pl.program_id(0)
    a = a_ref[...].astype(jnp.float32)                          # [row_tile, N]
    rows = lax.broadcasted_iota(jnp.int32, a.shape, 0) + i * row_tile
    cols = lax.broadcasted_iota(jnp.int32, a.shape, 1)
    a = a + (rows == cols).astype(jnp.float32)                  # A + I (this block)
    deg = jnp.sum(a, axis=-1, keepdims=True)                    # [row_tile, 1]
    inv_deg = jnp.where(deg == 0.0, 0.0, 1.0 / deg)             # pow(-1), inf -> 0
    a_hat_ref[...] = inv_deg * a


# --------------------------------------------------------------------------- #
# Main GCN kernel: one grid step = tb fused batch elements (rows = tb * n_pad).
# Propagation uses a block-diagonal A_blk = kron(I_tb, A_hat) -> 2 dense matmuls.
# --------------------------------------------------------------------------- #
def gcn_kernel(a_blk_ref, x_ref, w1_ref, b1_ref, w2_ref, b2_ref, o_ref):
    a_blk = a_blk_ref[...]                                      # bf16 [rows, rows]

    # ---- layer 1: fused linear, block-diag propagation, ReLU ----------------
    h = jnp.dot(x_ref[...], w1_ref[...],
                preferred_element_type=jnp.float32) + b1_ref[...]   # f32 [rows, hid]
    h = jnp.dot(a_blk, h.astype(jnp.bfloat16),
                preferred_element_type=jnp.float32)                 # f32 [rows, hid]
    h = jnp.maximum(h, 0.0).astype(jnp.bfloat16)                    # single downcast

    # ---- layer 2: fused linear, block-diag propagation, ReLU ----------------
    o = jnp.dot(h, w2_ref[...],
                preferred_element_type=jnp.float32) + b2_ref[...]   # f32 [rows, out_c]
    o = jnp.dot(a_blk, o.astype(jnp.bfloat16),
                preferred_element_type=jnp.float32)
    o_ref[...] = jnp.maximum(o, 0.0).astype(o_ref.dtype)


# --------------------------------------------------------------------------- #
# Heuristics (generation-aware, layout-safe).
# --------------------------------------------------------------------------- #
def _round_up(x, m):
    return -(-x // m) * m


def _choose_row_tile(n):
    if n % 8 != 0:
        return n                              # full-dim block (always legal)
    for t in (512, 256, 128, 64, 32, 16, 8):
        if n % t == 0:
            return t
    return n


def _choose_tb(batch, n_pad):
    """Batch elements fused per grid step (rows = tb * n_pad per step)."""
    if batch <= 1 or n_pad >= 256:
        return 1
    tb = max(1, min(batch, 512 // n_pad))     # target <= ~512 rows per step
    # Prefer >= 2 parallel grid steps (megacore sharding on v7x) as long as
    # each step still feeds the MXU with >= 128 rows.
    if tb >= batch and (batch // 2) * n_pad >= 128:
        tb = max(1, batch // 2)
    return min(tb, batch)


# --------------------------------------------------------------------------- #
# Wrapper: matches GCN.forward semantics.
# --------------------------------------------------------------------------- #
def gcn_forward(graph, flow_x, w1, b1, w2, b2, *, tb=None):
    """graph: [1, N, N]; flow_x: [B, N, H, D]; w1: [in_c, hid_c]; b1: [hid_c];
    w2: [hid_c, out_c]; b2: [out_c].  Returns [B, N, 1, out_c] (f32)."""
    a = graph[0].astype(jnp.float32)                          # data['graph'][0]
    B, N = flow_x.shape[0], flow_x.shape[1]
    x = flow_x.reshape(B, N, -1).astype(jnp.float32)          # flow_x.view(B, N, -1)
    in_c = x.shape[-1]
    hid_c = w1.shape[-1]
    out_c = w2.shape[-1]

    # -- A_hat = D^{-1}(A + I), computed once, tiled over row blocks.
    row_tile = _choose_row_tile(N)
    a_hat = pl.pallas_call(
        functools.partial(process_graph_kernel, row_tile=row_tile),
        out_shape=jax.ShapeDtypeStruct((N, N), jnp.float32),
        grid=(N // row_tile,),
        in_specs=[pl.BlockSpec((row_tile, N), lambda i: (i, 0))],
        out_specs=pl.BlockSpec((row_tile, N), lambda i: (i, 0)),
        compiler_params=pltpu.CompilerParams(dimension_semantics=("parallel",)),
    )(a)

    # -- pad the node dim (zero rows/cols) so every row block is layout-legal.
    n_pad = _round_up(N, 16)
    if n_pad != N:
        a_hat = jnp.zeros((n_pad, n_pad), jnp.float32).at[:N, :N].set(a_hat)
        x = jnp.concatenate([x, jnp.zeros((B, n_pad - N, in_c), x.dtype)], axis=1)

    # -- batches fused per grid step; pad batch dim up to num_steps * tb.
    if tb is None:
        tb = _choose_tb(B, n_pad)
    num_steps = -(-B // tb)                                   # cdiv
    b_pad = num_steps * tb
    if b_pad != B:
        x = jnp.concatenate(
            [x, jnp.zeros((b_pad - B, n_pad, in_c), x.dtype)], axis=0)
    rows = tb * n_pad

    # Block-diagonal propagation operator for one grid step (bf16 MXU operand).
    # TODO(synk): for very large N (>~2048) tile A_hat rows with an extra grid
    # axis instead of holding the full (rows, rows) operator in VMEM.
    a_blk = jnp.kron(jnp.eye(tb, dtype=jnp.float32), a_hat).astype(jnp.bfloat16)

    # Streamed input presented as a flat, bf16 [rows_total, in_c] slab.
    x2d = x.reshape(b_pad * n_pad, in_c).astype(jnp.bfloat16)

    out2d = pl.pallas_call(
        gcn_kernel,
        out_shape=jax.ShapeDtypeStruct((b_pad * n_pad, out_c), jnp.float32),
        grid_spec=pltpu.PrefetchScalarGridSpec(
            num_scalar_prefetch=0,
            grid=(num_steps,),
            in_specs=[
                pl.BlockSpec((rows, rows), lambda s: (0, 0)),     # A_blk (invariant)
                pl.BlockSpec((rows, in_c), lambda s: (s, 0)),     # x rows for step s
                pl.BlockSpec((in_c, hid_c), lambda s: (0, 0)),    # W1 (bf16)
                pl.BlockSpec((1, hid_c), lambda s: (0, 0)),       # b1 (f32)
                pl.BlockSpec((hid_c, out_c), lambda s: (0, 0)),   # W2 (bf16)
                pl.BlockSpec((1, out_c), lambda s: (0, 0)),       # b2 (f32)
            ],
            out_specs=pl.BlockSpec((rows, out_c), lambda s: (s, 0)),
        ),
        compiler_params=pltpu.CompilerParams(
            dimension_semantics=("parallel",),
            vmem_limit_bytes=32 * 1024 * 1024,
        ),
    )(a_blk, x2d,
      w1.astype(jnp.bfloat16), b1.reshape(1, hid_c).astype(jnp.float32),
      w2.astype(jnp.bfloat16), b2.reshape(1, out_c).astype(jnp.float32))

    out = out2d.reshape(b_pad, n_pad, out_c)[:B, :N, :]
    return out[:, :, None, :]                                 # unsqueeze(2)


if __name__ == "__main__":
    # Small shapes consistent with the module:
    #   B=2 batches, N=16 nodes, H=4 history steps, D=2 features -> in_c = 8
    #   hid_c=32, out_c=4
    B, N, H, D = 2, 16, 4, 2
    in_c, hid_c, out_c = H * D, 32, 4

    key = jax.random.PRNGKey(0)
    k_g, k_x, k_w1, k_b1, k_w2, k_b2 = jax.random.split(key, 6)

    # Symmetric, nonnegative adjacency with batch dim 1.
    adj = jax.random.uniform(k_g, (N, N), dtype=jnp.float32)
    adj = (adj + adj.T) * 0.5
    adj = jnp.where(adj > 0.6, adj, 0.0)
    graph = adj[None, :, :]                                   # [1, N, N]

    flow_x = jax.random.normal(k_x, (B, N, H, D), dtype=jnp.float32)

    # PyTorch Linear stores W as [out, in]; we generate W^T directly: [in, out].
    w1 = jax.random.normal(k_w1, (in_c, hid_c), dtype=jnp.float32) * 0.1
    b1 = jax.random.normal(k_b1, (hid_c,), dtype=jnp.float32) * 0.1
    w2 = jax.random.normal(k_w2, (hid_c, out_c), dtype=jnp.float32) * 0.1
    b2 = jax.random.normal(k_b2, (out_c,), dtype=jnp.float32) * 0.1

    out = gcn_forward(graph, flow_x, w1, b1, w2, b2)
    out = jax.block_until_ready(out)
    assert out.shape == (B, N, 1, out_c), out.shape

    # Plain-JAX f32 reference of the same math.  Kernel uses bf16 MXU operands
    # (f32 accumulation), so tolerance is loosened vs. the pure-f32 reference.
    a_ref_m = graph[0] + jnp.eye(N, dtype=jnp.float32)
    deg = jnp.sum(a_ref_m, axis=-1, keepdims=True)
    a_hat_ref = jnp.where(deg == 0.0, 0.0, 1.0 / deg) * a_ref_m
    xr = flow_x.reshape(B, N, -1)
    h = jnp.maximum(jnp.einsum("nm,bmh->bnh", a_hat_ref, xr @ w1 + b1), 0.0)
    ref = jnp.maximum(jnp.einsum("nm,bmh->bnh", a_hat_ref, h @ w2 + b2), 0.0)[:, :, None, :]
    assert jnp.allclose(out, ref, atol=2e-2, rtol=2e-2), float(jnp.max(jnp.abs(out - ref)))

    print("KERNEL_OK")
</pallas_src>

<mosaic_0001>
module attributes {stable_mosaic.version = 11 : i64} {
  func.func @process_graph_kernel(%arg0: i32, %arg1: memref<16x16xf32, #tpu.memory_space<vmem>>, %arg2: memref<16x16xf32, #tpu.memory_space<vmem>>) attributes {dimension_semantics = [#tpu.dimension_semantics<parallel>], iteration_bounds = array<i64: 1>, scalar_prefetch = 0 : i64, scratch_operands = 0 : i64, tpu.core_type = #tpu.core_type<tc>, window_params = [{transform_indices = @transform_0, window_bounds = array<i64: 16, 16>}, {transform_indices = @transform_1, window_bounds = array<i64: 16, 16>}]} {
    %c0 = arith.constant 0 : index
    %c0_0 = arith.constant 0 : index
    %0 = vector.load %arg1[%c0, %c0_0] : memref<16x16xf32, #tpu.memory_space<vmem>>, vector<16x16xf32>
    %1 = tpu.iota {dimensions = array<i32: 0>} : vector<16x16xi32>
    %c16_i32 = arith.constant 16 : i32
    %2 = arith.muli %arg0, %c16_i32 : i32
    %3 = vector.broadcast %2 : i32 to vector<16x16xi32>
    %4 = arith.addi %1, %3 : vector<16x16xi32>
    %5 = tpu.iota {dimensions = array<i32: 1>} : vector<16x16xi32>
    %6 = arith.cmpi eq, %4, %5 : vector<16x16xi32>
    %7 = arith.extui %6 : vector<16x16xi1> to vector<16x16xi32>
    %8 = arith.sitofp %7 : vector<16x16xi32> to vector<16x16xf32>
    %9 = arith.addf %0, %8 : vector<16x16xf32>
    %cst = arith.constant dense<0.000000e+00> : vector<16xf32>
    %10 = vector.multi_reduction <add>, %9, %cst [1] : vector<16x16xf32> to vector<16xf32>
    %11 = vector.shape_cast %10 : vector<16xf32> to vector<16x1xf32>
    %cst_1 = arith.constant 0.000000e+00 : f32
    %12 = vector.broadcast %cst_1 : f32 to vector<16x1xf32>
    %13 = arith.cmpf oeq, %11, %12 : vector<16x1xf32>
    %cst_2 = arith.constant 1.000000e+00 : f32
    %14 = vector.broadcast %cst_2 : f32 to vector<16x1xf32>
    %15 = arith.divf %14, %11 : vector<16x1xf32>
    %cst_3 = arith.constant 0.000000e+00 : f32
    %16 = vector.broadcast %cst_3 : f32 to vector<16x1xf32>
    %17 = arith.select %13, %16, %15 : vector<16x1xi1>, vector<16x1xf32>
    %18 = vector.broadcast %17 : vector<16x1xf32> to vector<16x16xf32>
    %19 = arith.mulf %18, %9 : vector<16x16xf32>
    %c0_4 = arith.constant 0 : index
    %c0_5 = arith.constant 0 : index
    %20 = vector.load %arg2[%c0_4, %c0_5] : memref<16x16xf32, #tpu.memory_space<vmem>>, vector<16x16xf32>
    tpu.vector_store %arg2[%c0_4, %c0_5], %19 {strides = array<i32>} : memref<16x16xf32, #tpu.memory_space<vmem>>, vector<16x16xf32>,
    return
  }
  func.func @transform_0(%arg0: i32) -> (i32, i32) {
    %c0_i32 = arith.constant 0 : i32
    %c0_i32_0 = arith.constant 0 : i32
    return %arg0, %c0_i32 : i32, i32
  }
  func.func @transform_1(%arg0: i32) -> (i32, i32) {
    %c0_i32 = arith.constant 0 : i32
    %c0_i32_0 = arith.constant 0 : i32
    return %arg0, %c0_i32 : i32, i32
  }
}

</mosaic_0001>

<llo_original>
// kernel: tpu_custom_call.1
$region0: #{tpu_custom_call.1}
  #allocation0 [shape = 'u32[]', space=smem, size = 0x4, offset = 0x4, fixed_abs, tag = 'smem constant byte address 0x4 - core index']
  #allocation1 [shape = 'u32[144,128]{1,0:T(1,128)}', space=vmem, size = 0x12000, scoped, tag = 'internal scratch']
  %s0 = inlined_call_operand.hbm [shape: f32[16,16], index: 0, kind: input, shape index: {}]
  %s1 = inlined_call_operand.hbm [shape: f32[16,16], index: 1, kind: output, shape index: {}]
  %s2 = sld [smem:[#allocation0]]
  $region18: #{tpu_custom_call.1} parent=0
    _
  %s4 = ssub.s32 1, %s2
  %s5 = scalar_select 0, %s4, %s2
  $region1: #{tpu_custom_call.1} parent=0
    #allocation2 [shape = 'u8[8192]{0}', space=vmem, size = 0x2000, scoped, tag = 'input window, operand 0, single buffered']
    #allocation3 [shape = 's32[1]{0}', space=sflag, size = 0x4, scoped, tag = 'scoped memory for tpu_custom_call.1']
    #allocation4 [shape = 's32[1]{0}', space=sflag, size = 0x4, scoped, tag = 'scoped memory for tpu_custom_call.1']
    #allocation5 [shape = 'u8[8192]{0}', space=vmem, size = 0x2000, scoped, tag = 'output window, operand 0, single buffered']
    %6 = vsyncpa [#allocation3], 0
    %7 = vsyncpa [#allocation4], 0
    // Predicated region
    $region2: #{tpu_custom_call.1} parent=1 // pred_check
      _
    $region3: #{tpu_custom_call.1} parent=1 // pred_check_branch
      %9 = sbr.rel (0) target = $region5
    $region4: #{tpu_custom_call.1} parent=1 // pred_region
      %s11 = ssub.s32 256, 256
      %12 = vsyncadd [#allocation3], %s11
      %s13 = sshll.u32 [#allocation2], 4
      %s14 = int_to_ptr.vmem [resolvable:$true] %s13
      %19 = dma.hbm_to_vmem [thread:$0]  %s0, 256, %s14, [#allocation3], 128, 128, 8
    $region5: #{tpu_custom_call.1} parent=1 // pred_fallthru
      _
    // Predicated region
    $region6: #{tpu_custom_call.1} parent=1 // pred_check
      _
    $region7: #{tpu_custom_call.1} parent=1 // pred_check_branch
      %21 = sbr.rel (0) target = $region9
    $region8: #{tpu_custom_call.1} parent=1 // pred_region
      %22 = dma.done [#allocation3], 256
    $region9: #{tpu_custom_call.1} parent=1 // pred_fallthru
      _
    %v23 = vld [vmem:[#allocation2] sm:$0xff]
    %v24 = vld [vmem:[#allocation2 + $0x8] sm:$0xff]
    %v25 = vlaneseq
    %v26 = vshrl.u32 %v25, 7
    %v27 = vadd.s32 %v26, 8
    %s28 = smul.u32 0, 16
    %v29 = vstv %s28
    %v30 = vadd.s32 %v26, %v29
    %v31 = vadd.s32 %v27, %v29
    %v32 = vlaneseq
    %v33 = vand.u32 %v32, 127
    %vm34 = vcmp.eq.s32.totalorder %v30, %v33
    %vm35 = vcmp.eq.s32.totalorder %v31, %v33
    %v36 = vsel %vm34, 1, 0
    %v37 = vsel %vm35, 1, 0
    %v38 = vcvt.s32.f32 %v36
    %v39 = vcvt.s32.f32 %v37
    %v40 = vadd.f32 %v23, %v38
    %v41 = vadd.f32 %v24, %v39
    %vm42 = vcmask 130048
    %v43 = vsel %vm42, %v40, 0.0
    %44 = vadd.xlane.f32.xlu0 %v43
    %v45 = vpop.xlane.xlu0 %44
    %v46 = vsel %vm42, %v41, 0.0
    %47 = vadd.xlane.f32.xlu0 %v46
    %v48 = vpop.xlane.xlu0 %47
    %vm49 = vcmp.eq.f32.partialorder %v45, 0.0
    %vm50 = vcmp.eq.f32.partialorder %v48, 0.0
    %v51 = vrcp.pop %v45
    %v52 = vmul.f32 1.0, %v51
    %v53 = vrcp.pop %v48
    %v54 = vmul.f32 1.0, %v53
    %v55 = vsel %vm49, 0.0, %v52
    %v56 = vsel %vm50, 0.0, %v54
    %v57 = vmul.f32 %v55, %v40
    %v58 = vmul.f32 %v56, %v41
    %59 = vst.msk [vmem:[#allocation5] sm:$0xff] %vm42, %v57
    %60 = vst.msk [vmem:[#allocation5 + $0x8] sm:$0xff] %vm42, %v58
    // Predicated region
    $region10: #{tpu_custom_call.1} parent=1 // pred_check
      _
    $region11: #{tpu_custom_call.1} parent=1 // pred_check_branch
      %62 = sbr.rel (0) target = $region13
    $region12: #{tpu_custom_call.1} parent=1 // pred_region
      %s64 = ssub.s32 256, 256
      %65 = vsyncadd [#allocation4], %s64
      %s66 = sshll.u32 [#allocation5], 4
      %s67 = int_to_ptr.vmem [resolvable:$true] %s66
      %72 = dma.vmem_to_hbm [thread:$0]  %s67, 256, %s1, [#allocation4], 128, 128, 8
    $region13: #{tpu_custom_call.1} parent=1 // pred_fallthru
      _
    // Predicated region
    $region14: #{tpu_custom_call.1} parent=1 // pred_check
      _
    $region15: #{tpu_custom_call.1} parent=1 // pred_check_branch
      %74 = sbr.rel (0) target = $region17
    $region16: #{tpu_custom_call.1} parent=1 // pred_region
      %75 = dma.done [#allocation4], 256
    $region17: #{tpu_custom_call.1} parent=1 // pred_fallthru
      _
    %76 = vsyncpa [#allocation3], 1
    %77 = vsyncpa [#allocation4], 1

</llo_original>
